<compile_context>
chip_gen: v7x
topology: tpu7x:2x2x1
jax: 0.10.0
libtpu: 0.0.40
codegen_flags: <defaults>
</compile_context>

<pallas_src>
import functools

import jax
import jax.numpy as jnp
from jax import lax
from jax.experimental import pallas as pl
from jax.experimental.pallas import tpu as pltpu


# bf16 MXU operands (f32 accumulate) per the perf review; set to jnp.float32
# for bit-closer parity with the PyTorch float32 reference.
MXU_DTYPE = jnp.bfloat16


def _paa_kernel(plen_ref, rlen_ref, p_ref, r_ref, w_ref, b_ref, out_ref,
                *, mxu_dtype):
    b_idx = pl.program_id(0)
    plen = plen_ref[b_idx]            # scalar int32 (SMEM, scalar-prefetched)
    rlen = rlen_ref[b_idx]            # scalar int32 (SMEM, scalar-prefetched)

    P = p_ref[0]                      # (Lp, H2) f32 == product_repr[b].T
    R = r_ref[0]                      # (Lr, H2) f32 == review_repr[b].T
    Lp, H2 = P.shape
    Lr = R.shape[0]

    Pb = P.astype(mxu_dtype)
    Rb = R.astype(mxu_dtype)
    Wb = w_ref[...].astype(mxu_dtype)

    # p = relu(product_repr^T @ w + b)                        -> (Lp, H2)
    p = jnp.dot(Pb, Wb, preferred_element_type=jnp.float32)
    p = jnp.maximum(p + b_ref[...], 0.0)                       # f32 bias + relu

    # q^T = review_repr^T @ p^T (contract over H2)            -> (Lr, Lp)
    # Computing the transposed score matrix keeps every dot NN/NT and puts the
    # softmax axis (product positions) on lanes.
    qT = lax.dot_general(Rb, p.astype(mxu_dtype),
                         (((1,), (1,)), ((), ())),
                         preferred_element_type=jnp.float32)

    # mask padded product positions, softmax over product axis (lanes), f32
    prod_pos = lax.broadcasted_iota(jnp.int32, (Lr, Lp), 1)
    qT = jnp.where(prod_pos < plen, qT, jnp.float32(-1e23))
    m = jnp.max(qT, axis=1, keepdims=True)
    e = jnp.exp(qT - m)
    denom = jnp.sum(e, axis=1, keepdims=True)
    attnT = e * pl.reciprocal(denom, approx=True)              # (Lr, Lp)

    # r = (product_repr @ q + review_repr)^T                  -> (Lr, H2)
    r = jnp.dot(attnT.astype(mxu_dtype), Pb,
                preferred_element_type=jnp.float32) + R

    # zero padded review positions (sublane axis)
    rev_pos = lax.broadcasted_iota(jnp.int32, (Lr, H2), 0)
    r = jnp.where(rev_pos < rlen, r, 0.0)

    out_ref[0] = r.astype(out_ref.dtype)


def product_aware_attention(product_repr, product_seq_lens,
                            review_repr, review_seq_lens, w, b,
                            *, mxu_dtype=MXU_DTYPE):
    """ProductAwareAttention.forward.

    product_repr: (B, H2, Lp) f32, review_repr: (B, H2, Lr) f32 (PyTorch layout)
    product_seq_lens / review_seq_lens: (B,) int
    w: (H2, H2); b: (1, H2)   (the module's (1, 1, H2) parameter, squeezed)
    returns r: (B, Lr, H2) f32
    """
    B, H2, Lp = product_repr.shape
    Lr = review_repr.shape[2]

    # Pure layout glue: kernel consumes seq-major (L, H2) tiles so the hidden
    # dim lives on lanes and the output is emitted directly as (B, Lr, H2).
    P = jnp.swapaxes(product_repr, 1, 2).astype(jnp.float32)   # (B, Lp, H2)
    R = jnp.swapaxes(review_repr, 1, 2).astype(jnp.float32)    # (B, Lr, H2)
    plen = product_seq_lens.astype(jnp.int32).reshape(B)
    rlen = review_seq_lens.astype(jnp.int32).reshape(B)
    w32 = w.astype(jnp.float32)
    b32 = b.reshape(1, H2).astype(jnp.float32)

    kernel = functools.partial(_paa_kernel, mxu_dtype=mxu_dtype)
    grid_spec = pltpu.PrefetchScalarGridSpec(
        num_scalar_prefetch=2,
        grid=(B,),
        in_specs=[
            pl.BlockSpec((1, Lp, H2), lambda i, plen, rlen: (i, 0, 0)),
            pl.BlockSpec((1, Lr, H2), lambda i, plen, rlen: (i, 0, 0)),
            pl.BlockSpec((H2, H2), lambda i, plen, rlen: (0, 0)),
            pl.BlockSpec((1, H2), lambda i, plen, rlen: (0, 0)),
        ],
        out_specs=pl.BlockSpec((1, Lr, H2), lambda i, plen, rlen: (i, 0, 0)),
    )
    return pl.pallas_call(
        kernel,
        out_shape=jax.ShapeDtypeStruct((B, Lr, H2), jnp.float32),
        grid_spec=grid_spec,
        compiler_params=pltpu.CompilerParams(
            dimension_semantics=("parallel",)),   # megacore split on v7x
    )(plen, rlen, P, R, w32, b32)


# ------------------------- pure-JAX reference (f32) -------------------------

def product_aware_attention_ref(product_repr, p_lens, review_repr, r_lens, w, b):
    B, H2, Lp = product_repr.shape
    Lr = review_repr.shape[2]
    p = jnp.einsum('bhp,hk->bpk', product_repr, w) + b.reshape(1, 1, H2)
    p = jnp.maximum(p, 0.0)
    q = jnp.einsum('bpk,bkr->bpr', p, review_repr)
    pmask = (jnp.arange(Lp)[None, :] < p_lens[:, None])[:, :, None]
    q = q * pmask.astype(jnp.float32) + (~pmask).astype(jnp.float32) * -1e23
    q = jax.nn.softmax(q, axis=1)
    r = jnp.einsum('bhp,bpr->bhr', product_repr, q) + review_repr
    r = jnp.swapaxes(r, 1, 2)
    rmask = (jnp.arange(Lr)[None, :] < r_lens[:, None])[:, :, None]
    return r * rmask.astype(jnp.float32)


# ---------------------------------- main ----------------------------------

if __name__ == "__main__":
    key = jax.random.PRNGKey(0)
    B, Lp, Lr = 2, 8, 12        # batch, product max_len, review max_len
    H = 16                      # RNN hidden per direction
    H2 = 2 * H                  # bidirectional hidden dimension = 32
    ks = jax.random.split(key, 4)

    p_lens = jnp.array([8, 5], jnp.int32)
    r_lens = jnp.array([10, 12], jnp.int32)

    # Encoder outputs in the PyTorch layout (B, H2, L); padded positions zeroed
    # (pad_packed_sequence semantics). Modest scale keeps logits O(1).
    product_repr = 0.25 * jax.random.normal(ks[0], (B, H2, Lp), jnp.float32)
    review_repr = 0.25 * jax.random.normal(ks[1], (B, H2, Lr), jnp.float32)
    product_repr = product_repr * (
        jnp.arange(Lp)[None, None, :] < p_lens[:, None, None])
    review_repr = review_repr * (
        jnp.arange(Lr)[None, None, :] < r_lens[:, None, None])

    # xavier_uniform_ init as in the module
    lim_w = (6.0 / (H2 + H2)) ** 0.5
    w = jax.random.uniform(ks[2], (H2, H2), jnp.float32, -lim_w, lim_w)
    lim_b = (6.0 / (1 + H2)) ** 0.5
    b = jax.random.uniform(ks[3], (1, H2), jnp.float32, -lim_b, lim_b)

    fwd = jax.jit(product_aware_attention)
    out = fwd(product_repr, p_lens, review_repr, r_lens, w, b)
    jax.block_until_ready(out)
    assert out.shape == (B, Lr, H2)

    ref = product_aware_attention_ref(product_repr, p_lens,
                                      review_repr, r_lens, w, b)
    err = float(jnp.max(jnp.abs(out - ref)))
    # loose tolerance: bf16 MXU operands + approx EUP reciprocal by design
    assert err < 3e-2, f"max abs err {err}"
    print("KERNEL_OK")
</pallas_src>

<mosaic_0001>
module attributes {stable_mosaic.version = 11 : i64} {
  func.func @_paa_kernel(%arg0: i32, %arg1: memref<2xi32, #tpu.memory_space<smem>>, %arg2: memref<2xi32, #tpu.memory_space<smem>>, %arg3: memref<1x8x32xf32, #tpu.memory_space<vmem>>, %arg4: memref<1x12x32xf32, #tpu.memory_space<vmem>>, %arg5: memref<32x32xf32, #tpu.memory_space<vmem>>, %arg6: memref<1x32xf32, #tpu.memory_space<vmem>>, %arg7: memref<1x12x32xf32, #tpu.memory_space<vmem>>) attributes {dimension_semantics = [#tpu.dimension_semantics<parallel>], iteration_bounds = array<i64: 2>, scalar_prefetch = 2 : i64, scratch_operands = 0 : i64, tpu.core_type = #tpu.core_type<tc>, window_params = [{transform_indices = @transform_0, window_bounds = array<i64: 1, 8, 32>}, {transform_indices = @transform_1, window_bounds = array<i64: 1, 12, 32>}, {pipeline_mode = #tpu.pipeline_mode<synchronous>, transform_indices = @transform_2, window_bounds = array<i64: 32, 32>}, {pipeline_mode = #tpu.pipeline_mode<synchronous>, transform_indices = @transform_3, window_bounds = array<i64: 1, 32>}, {transform_indices = @transform_4, window_bounds = array<i64: 1, 12, 32>}]} {
    %0 = arith.index_cast %arg0 : i32 to index
    %1 = memref.load %arg1[%0] : memref<2xi32, #tpu.memory_space<smem>>
    %2 = arith.index_cast %arg0 : i32 to index
    %3 = memref.load %arg2[%2] : memref<2xi32, #tpu.memory_space<smem>>
    %c0 = arith.constant 0 : index
    %c0_0 = arith.constant 0 : index
    %c0_1 = arith.constant 0 : index
    %4 = vector.load %arg3[%c0, %c0_0, %c0_1] : memref<1x8x32xf32, #tpu.memory_space<vmem>>, vector<1x8x32xf32>
    %5 = vector.shape_cast %4 : vector<1x8x32xf32> to vector<8x32xf32>
    %c0_2 = arith.constant 0 : index
    %c0_3 = arith.constant 0 : index
    %c0_4 = arith.constant 0 : index
    %6 = vector.load %arg4[%c0_2, %c0_3, %c0_4] : memref<1x12x32xf32, #tpu.memory_space<vmem>>, vector<1x12x32xf32>
    %7 = vector.shape_cast %6 : vector<1x12x32xf32> to vector<12x32xf32>
    %8 = arith.truncf %5 : vector<8x32xf32> to vector<8x32xbf16>
    %9 = arith.truncf %7 : vector<12x32xf32> to vector<12x32xbf16>
    %c0_5 = arith.constant 0 : index
    %c0_6 = arith.constant 0 : index
    %10 = vector.load %arg5[%c0_5, %c0_6] : memref<32x32xf32, #tpu.memory_space<vmem>>, vector<32x32xf32>
    %11 = arith.truncf %10 : vector<32x32xf32> to vector<32x32xbf16>
    %cst = arith.constant dense<0.000000e+00> : vector<8x32xf32>
    %12 = tpu.matmul %8, %11, %cst {dimension_numbers = #tpu.dot_dimension_numbers<[1], [0], [0], [1], [0, 0, 1, 1], [], []>} : vector<8x32xbf16>, vector<32x32xbf16>, vector<8x32xf32> -> vector<8x32xf32>
    %c0_7 = arith.constant 0 : index
    %c0_8 = arith.constant 0 : index
    %13 = vector.load %arg6[%c0_7, %c0_8] : memref<1x32xf32, #tpu.memory_space<vmem>>, vector<1x32xf32>
    %14 = vector.broadcast %13 : vector<1x32xf32> to vector<8x32xf32>
    %15 = arith.addf %12, %14 : vector<8x32xf32>
    %cst_9 = arith.constant 0.000000e+00 : f32
    %16 = vector.broadcast %cst_9 : f32 to vector<8x32xf32>
    %17 = arith.maximumf %15, %16 : vector<8x32xf32>
    %18 = arith.truncf %17 : vector<8x32xf32> to vector<8x32xbf16>
    %cst_10 = arith.constant dense<0.000000e+00> : vector<12x8xf32>
    %19 = tpu.matmul %9, %18, %cst_10 {dimension_numbers = #tpu.dot_dimension_numbers<[1], [1], [0], [0], [0, 0, 1, 0], [], []>} : vector<12x32xbf16>, vector<8x32xbf16>, vector<12x8xf32> -> vector<12x8xf32>
    %20 = tpu.iota {dimensions = array<i32: 1>} : vector<12x8xi32>
    %21 = vector.broadcast %1 : i32 to vector<12x8xi32>
    %22 = arith.cmpi slt, %20, %21 : vector<12x8xi32>
    %cst_11 = arith.constant -9.99999977E+22 : f32
    %23 = vector.broadcast %cst_11 : f32 to vector<12x8xf32>
    %24 = arith.select %22, %19, %23 : vector<12x8xi1>, vector<12x8xf32>
    %cst_12 = arith.constant dense<0xFF800000> : vector<12xf32>
    %25 = vector.multi_reduction <maximumf>, %24, %cst_12 [1] : vector<12x8xf32> to vector<12xf32>
    %26 = vector.shape_cast %25 : vector<12xf32> to vector<12x1xf32>
    %27 = vector.broadcast %26 : vector<12x1xf32> to vector<12x8xf32>
    %28 = arith.subf %24, %27 : vector<12x8xf32>
    %29 = math.exp %28 : vector<12x8xf32>
    %cst_13 = arith.constant dense<0.000000e+00> : vector<12xf32>
    %30 = vector.multi_reduction <add>, %29, %cst_13 [1] : vector<12x8xf32> to vector<12xf32>
    %31 = vector.shape_cast %30 : vector<12xf32> to vector<12x1xf32>
    %32 = tpu.reciprocal %31 {approx = true} : vector<12x1xf32> -> vector<12x1xf32>
    %33 = vector.broadcast %32 : vector<12x1xf32> to vector<12x8xf32>
    %34 = arith.mulf %29, %33 : vector<12x8xf32>
    %35 = arith.truncf %34 : vector<12x8xf32> to vector<12x8xbf16>
    %cst_14 = arith.constant dense<0.000000e+00> : vector<12x32xf32>
    %36 = tpu.matmul %35, %8, %cst_14 {dimension_numbers = #tpu.dot_dimension_numbers<[1], [0], [0], [1], [0, 0, 1, 1], [], []>} : vector<12x8xbf16>, vector<8x32xbf16>, vector<12x32xf32> -> vector<12x32xf32>
    %37 = arith.addf %36, %7 : vector<12x32xf32>
    %38 = tpu.iota {dimensions = array<i32: 0>} : vector<12x32xi32>
    %39 = vector.broadcast %3 : i32 to vector<12x32xi32>
    %40 = arith.cmpi slt, %38, %39 : vector<12x32xi32>
    %cst_15 = arith.constant 0.000000e+00 : f32
    %41 = vector.broadcast %cst_15 : f32 to vector<12x32xf32>
    %42 = arith.select %40, %37, %41 : vector<12x32xi1>, vector<12x32xf32>
    %c0_16 = arith.constant 0 : index
    %c0_17 = arith.constant 0 : index
    %c0_18 = arith.constant 0 : index
    %43 = vector.load %arg7[%c0_16, %c0_17, %c0_18] : memref<1x12x32xf32, #tpu.memory_space<vmem>>, vector<1x12x32xf32>
    %44 = vector.shape_cast %43 : vector<1x12x32xf32> to vector<12x32xf32>
    %45 = vector.shape_cast %42 : vector<12x32xf32> to vector<1x12x32xf32>
    tpu.vector_store %arg7[%c0_16, %c0_17, %c0_18], %45 {strides = array<i32>} : memref<1x12x32xf32, #tpu.memory_space<vmem>>, vector<1x12x32xf32>,
    return
  }
  func.func @transform_0(%arg0: i32, %arg1: memref<2xi32, #tpu.memory_space<smem>>, %arg2: memref<2xi32, #tpu.memory_space<smem>>) -> (i32, i32, i32) {
    %c0_i32 = arith.constant 0 : i32
    %c0_i32_0 = arith.constant 0 : i32
    %c0_i32_1 = arith.constant 0 : i32
    return %arg0, %c0_i32, %c0_i32_0 : i32, i32, i32
  }
  func.func @transform_1(%arg0: i32, %arg1: memref<2xi32, #tpu.memory_space<smem>>, %arg2: memref<2xi32, #tpu.memory_space<smem>>) -> (i32, i32, i32) {
    %c0_i32 = arith.constant 0 : i32
    %c0_i32_0 = arith.constant 0 : i32
    %c0_i32_1 = arith.constant 0 : i32
    return %arg0, %c0_i32, %c0_i32_0 : i32, i32, i32
  }
  func.func @transform_2(%arg0: i32, %arg1: memref<2xi32, #tpu.memory_space<smem>>, %arg2: memref<2xi32, #tpu.memory_space<smem>>) -> (i32, i32) {
    %c0_i32 = arith.constant 0 : i32
    %c0_i32_0 = arith.constant 0 : i32
    %c0_i32_1 = arith.constant 0 : i32
    return %c0_i32, %c0_i32_0 : i32, i32
  }
  func.func @transform_3(%arg0: i32, %arg1: memref<2xi32, #tpu.memory_space<smem>>, %arg2: memref<2xi32, #tpu.memory_space<smem>>) -> (i32, i32) {
    %c0_i32 = arith.constant 0 : i32
    %c0_i32_0 = arith.constant 0 : i32
    %c0_i32_1 = arith.constant 0 : i32
    return %c0_i32, %c0_i32_0 : i32, i32
  }
  func.func @transform_4(%arg0: i32, %arg1: memref<2xi32, #tpu.memory_space<smem>>, %arg2: memref<2xi32, #tpu.memory_space<smem>>) -> (i32, i32, i32) {
    %c0_i32 = arith.constant 0 : i32
    %c0_i32_0 = arith.constant 0 : i32
    %c0_i32_1 = arith.constant 0 : i32
    return %arg0, %c0_i32, %c0_i32_0 : i32, i32, i32
  }
}

</mosaic_0001>

<llo_original>
// kernel: product_aware_attention.1
$region0: #{product_aware_attention.1}
  #allocation0 [shape = 'u32[]', space=smem, size = 0x4, offset = 0x4, fixed_abs, tag = 'smem constant byte address 0x4 - core index']
  #allocation1 [shape = 'u32[144,128]{1,0:T(1,128)}', space=vmem, size = 0x12000, scoped, tag = 'internal scratch']
  #allocation2 [shape = 's32[1]{0}', space=sflag, size = 0x4, scoped, tag = 'scoped memory for product_aware_attention.1']
  #allocation3 [shape = 'u8[512]{0}', space=smem, size = 0x200, scoped, tag = 'prefetched SMEM operand 0']
  #allocation4 [shape = 'u8[512]{0}', space=smem, size = 0x200, scoped, tag = 'prefetched SMEM operand 1']
  %s0 = inlined_call_operand.vmem [shape: s32[2], index: 0, kind: input, shape index: {}]
  %s1 = inlined_call_operand.vmem [shape: s32[2], index: 1, kind: input, shape index: {}]
  %s2 = inlined_call_operand.vmem [shape: f32[2,8,32], index: 2, kind: input, shape index: {}]
  %s3 = inlined_call_operand.vmem [shape: f32[2,12,32], index: 3, kind: input, shape index: {}]
  %s4 = inlined_call_operand.vmem [shape: f32[32,32], index: 4, kind: input, shape index: {}]
  %s5 = inlined_call_operand.vmem [shape: f32[1,32], index: 5, kind: input, shape index: {}]
  %s6 = inlined_call_operand.vmem [shape: f32[2,12,32], index: 6, kind: output, shape index: {}]
  %s7 = sld [smem:[#allocation0]]
  $region49: #{product_aware_attention.1} parent=0
    _
  %s9 = ssub.s32 1, %s7
  %s10 = scalar_select 0, %s9, %s7
  %s11 = sshll.u32 %s0, 4
  %s12 = int_to_ptr.vmem [resolvable:$true] %s11
  %14 = dma.vmem_to_smem %s12, 16, [#allocation3], [#allocation2]
  %s15 = sshll.u32 %s1, 4
  %s16 = int_to_ptr.vmem [resolvable:$true] %s15
  %18 = dma.vmem_to_smem %s16, 16, [#allocation4], [#allocation2]
  %19 = dma.done [#allocation2], 32
  %20 = sfence
  loop: start=0, step=1, limit=4
  $region2: #{product_aware_attention.1} parent=0 // loop_pre_header
    _
  $region3: #{product_aware_attention.1} parent=0 // loop_header
    %s22 = sphi 0, %s26
    %p23 = scmp.ge.s32.totalorder %s22, 4
    %s32 = sphi 0, %s34
    %s35 = sphi 0, %s32
    %s36 = sphi 0, %s35
    %s52 = sphi 0, %s36
    %s58 = sphi 0, %s60
    %s61 = sphi 0, %s58
    %s62 = sphi 0, %s61
    %s78 = sphi 0, %s62
    %s82 = sphi 0, %s82
    %s84 = sphi 0, %s82
    %s85 = sphi 0, %s84
    %s99 = sphi 0, %s85
    %s103 = sphi 0, %s103
    %s105 = sphi 0, %s103
    %s106 = sphi 0, %s105
    %s120 = sphi 0, %s106
    %s126 = sphi 0, %s128
    %s129 = sphi 0, %s126
    %s130 = sphi 0, %s129
    %s146 = sphi 0, %s130
  $region4: #{product_aware_attention.1} parent=0 // loop_header_branch
    %25 = sbr.rel (%p23) target = $region8
  $region5: #{product_aware_attention.1} parent=0 // loop_body
    %s27 = ssub.s32 %s22, 1
    %s28 = ssub.s32 %s22, 2
    %s29 = sadd.s32 %s22, 1
    %s30 = ssub.s32 %s22, %s29
    %p31 = scmp.eq.s32.totalorder %s30, 0
    %s33 = sadd.s32 %s32, 1
    %s34 = scalar_select %p31, %s32, %s33
    %p37 = pneg %p31
    %p38 = scmp.eq.s32.totalorder %s22, 1
    %p39 = por %p37, %p38
    %p40 = scmp.ne.s32.totalorder %s32, %s35
    %p41 = scmp.eq.s32.totalorder %s22, 0
    %p42 = por %p40, %p41
    %p43 = scmp.ne.s32.totalorder %s32, %s35
    %p44 = scmp.eq.s32.totalorder %s27, 1
    %p45 = por %p43, %p44
    %p46 = scmp.ne.s32.totalorder %s35, %s36
    %p47 = scmp.eq.s32.totalorder %s27, 0
    %p48 = por %p46, %p47
    %p49 = scmp.ne.s32.totalorder %s35, %s36
    %p50 = scmp.eq.s32.totalorder %s28, 1
    %p51 = por %p49, %p50
    %p53 = scmp.ne.s32.totalorder %s36, %s52
    %p54 = scmp.eq.s32.totalorder %s28, 0
    %p55 = por %p53, %p54
    %s56 = ssub.s32 %s22, %s29
    %p57 = scmp.eq.s32.totalorder %s56, 0
    %s59 = sadd.s32 %s58, 1
    %s60 = scalar_select %p57, %s58, %s59
    %p63 = pneg %p57
    %p64 = scmp.eq.s32.totalorder %s22, 1
    %p65 = por %p63, %p64
    %p66 = scmp.ne.s32.totalorder %s58, %s61
    %p67 = scmp.eq.s32.totalorder %s22, 0
    %p68 = por %p66, %p67
    %p69 = scmp.ne.s32.totalorder %s58, %s61
    %p70 = scmp.eq.s32.totalorder %s27, 1
    %p71 = por %p69, %p70
    %p72 = scmp.ne.s32.totalorder %s61, %s62
    %p73 = scmp.eq.s32.totalorder %s27, 0
    %p74 = por %p72, %p73
    %p75 = scmp.ne.s32.totalorder %s61, %s62
    %p76 = scmp.eq.s32.totalorder %s28, 1
    %p77 = por %p75, %p76
    %p79 = scmp.ne.s32.totalorder %s62, %s78
    %p80 = scmp.eq.s32.totalorder %s28, 0
    %p81 = por %p79, %p80
    %s83 = sadd.s32 %s82, 1
    %p86 = scmp.eq.s32.totalorder %s22, 1
    %p87 = scmp.ne.s32.totalorder %s82, %s84
    %p88 = scmp.eq.s32.totalorder %s22, 0
    %p89 = por %p87, %p88
    %p90 = scmp.ne.s32.totalorder %s82, %s84
    %p91 = scmp.eq.s32.totalorder %s27, 1
    %p92 = por %p90, %p91
    %p93 = scmp.ne.s32.totalorder %s84, %s85
    %p94 = scmp.eq.s32.totalorder %s27, 0
    %p95 = por %p93, %p94
    %p96 = scmp.ne.s32.totalorder %s84, %s85
    %p97 = scmp.eq.s32.totalorder %s28, 1
    %p98 = por %p96, %p97
    %p100 = scmp.ne.s32.totalorder %s85, %s99
    %p101 = scmp.eq.s32.totalorder %s28, 0
    %p102 = por %p100, %p101
    %s104 = sadd.s32 %s103, 1
    %p107 = scmp.eq.s32.totalorder %s22, 1
    %p108 = scmp.ne.s32.totalorder %s103, %s105
    %p109 = scmp.eq.s32.totalorder %s22, 0
    %p110 = por %p108, %p109
    %p111 = scmp.ne.s32.totalorder %s103, %s105
    %p112 = scmp.eq.s32.totalorder %s27, 1
    %p113 = por %p111, %p112
    %p114 = scmp.ne.s32.totalorder %s105, %s106
    %p115 = scmp.eq.s32.totalorder %s27, 0
    %p116 = por %p114, %p115
    %p117 = scmp.ne.s32.totalorder %s105, %s106
    %p118 = scmp.eq.s32.totalorder %s28, 1
    %p119 = por %p117, %p118
    %p121 = scmp.ne.s32.totalorder %s106, %s120
    %p122 = scmp.eq.s32.totalorder %s28, 0
    %p123 = por %p121, %p122
    %s124 = ssub.s32 %s22, %s29
    %p125 = scmp.eq.s32.totalorder %s124, 0
    %s127 = sadd.s32 %s126, 1
    %s128 = scalar_select %p125, %s126, %s127
    %p131 = pneg %p125
    %p132 = scmp.eq.s32.totalorder %s22, 1
    %p133 = por %p131, %p132
    %p134 = scmp.ne.s32.totalorder %s126, %s129
    %p135 = scmp.eq.s32.totalorder %s22, 0
    %p136 = por %p134, %p135
    %p137 = scmp.ne.s32.totalorder %s126, %s129
    %p138 = scmp.eq.s32.totalorder %s27, 1
    %p139 = por %p137, %p138
    %p140 = scmp.ne.s32.totalorder %s129, %s130
    %p141 = scmp.eq.s32.totalorder %s27, 0
    %p142 = por %p140, %p141
    %p143 = scmp.ne.s32.totalorder %s129, %s130
    %p144 = scmp.eq.s32.totalorder %s28, 1
    %p145 = por %p143, %p144
    %p147 = scmp.ne.s32.totalorder %s130, %s146
    %p148 = scmp.eq.s32.totalorder %s28, 0
    %p149 = por %p147, %p148
    %p150 = scmp.le.s32.totalorder 1, %s22
    %p151 = scmp.lt.s32.totalorder %s22, 3
    %p152 = pnand %p150, %p151
    %p153 = pneg %p152
    // Predicated region
    $region9: #{product_aware_attention.1} parent=5 // pred_check
      _
    $region10: #{product_aware_attention.1} parent=5 // pred_check_branch
      %155 = sbr.rel (%p152) target = $region12
    $region11: #{product_aware_attention.1} parent=5 // pred_region
      %s156 = ssub.s32 %s22, 1
      // Predicated region
      $region13: #{product_aware_attention.1} parent=11 // pred_check
        %p157 = pneg %p95
      $region14: #{product_aware_attention.1} parent=11 // pred_check_branch
        %159 = sbr.rel (%p157) target = $region16
      $region15: #{product_aware_attention.1} parent=11 // pred_region
        _
      $region16: #{product_aware_attention.1} parent=11 // pred_fallthru
        _
      // Predicated region
      $region17: #{product_aware_attention.1} parent=11 // pred_check
        %p160 = pneg %p116
      $region18: #{product_aware_attention.1} parent=11 // pred_check_branch
        %162 = sbr.rel (%p160) target = $region20
      $region19: #{product_aware_attention.1} parent=11 // pred_region
        _
      $region20: #{product_aware_attention.1} parent=11 // pred_fallthru
        _
    $region12: #{product_aware_attention.1} parent=5 // pred_fallthru
      _
    %p163 = scmp.lt.s32.totalorder %s22, 2
    // Predicated region
    $region21: #{product_aware_attention.1} parent=5 // pred_check
      %p164 = pneg %p163
    $region22: #{product_aware_attention.1} parent=5 // pred_check_branch
      %166 = sbr.rel (%p164) target = $region24
    $region23: #{product_aware_attention.1} parent=5 // pred_region
      // Predicated region
      $region25: #{product_aware_attention.1} parent=23 // pred_check
        %p167 = pneg %p42
      $region26: #{product_aware_attention.1} parent=23 // pred_check_branch
        %169 = sbr.rel (%p167) target = $region28
      $region27: #{product_aware_attention.1} parent=23 // pred_region
        %p170 = scmp.lt.s32.totalorder %s22, 1
        %s171 = scalar_select %p170, %s22, 1
        %s172 = smul.addr %s171, 8
        %s173 = scalar_lea.vmem %s2, %s172
      $region28: #{product_aware_attention.1} parent=23 // pred_fallthru
        _
      // Predicated region
      $region29: #{product_aware_attention.1} parent=23 // pred_check
        %p174 = pneg %p68
      $region30: #{product_aware_attention.1} parent=23 // pred_check_branch
        %176 = sbr.rel (%p174) target = $region32
      $region31: #{product_aware_attention.1} parent=23 // pred_region
        %p177 = scmp.lt.s32.totalorder %s22, 1
        %s178 = scalar_select %p177, %s22, 1
        %s179 = smul.addr %s178, 2
        %s180 = smul.addr %s179, 8
        %s181 = scalar_lea.vmem %s3, %s180
      $region32: #{product_aware_attention.1} parent=23 // pred_fallthru
        _
    $region24: #{product_aware_attention.1} parent=5 // pred_fallthru
      _
    %p182 = scmp.le.s32.totalorder 1, %s22
    %p183 = scmp.lt.s32.totalorder %s22, 3
    %p184 = pnand %p182, %p183
    %p185 = pneg %p184
    // Predicated region
    $region33: #{product_aware_attention.1} parent=5 // pred_check
      _
    $region34: #{product_aware_attention.1} parent=5 // pred_check_branch
      %187 = sbr.rel (%p184) target = $region36
    $region35: #{product_aware_attention.1} parent=5 // pred_region
      %s188 = ssub.s32 %s22, 1
      %p189 = scmp.lt.s32.totalorder %s27, 1
      %s190 = scalar_select %p189, %s27, 1
      %s191 = smul.addr %s190, 8
      %s192 = scalar_lea.vmem %s2, %s191
      %p193 = pneg %p48
      %p194 = pneg %p45
      %p195 = scmp.lt.s32.totalorder %s27, 1
      %s196 = scalar_select %p195, %s27, 1
      %s197 = smul.addr %s196, 2
      %s198 = smul.addr %s197, 8
      %s199 = scalar_lea.vmem %s3, %s198
      %p200 = pneg %p74
      %p201 = pneg %p71
      %p202 = pneg %p95
      %p203 = pneg %p92
      %p204 = pneg %p116
      %p205 = pneg %p113
      %p206 = pneg %p142
      %p207 = pneg %p139
      %p208 = scmp.lt.s32.totalorder %s27, 1
      %s209 = scalar_select %p208, %s27, 1
      %s210 = smul.addr %s209, 2
      %s211 = smul.addr %s210, 8
      %s212 = scalar_lea.vmem %s6, %s211
      %p213 = scmp.lt.s32.totalorder %s27, 1
      %s214 = scalar_select %p213, %s27, 1
      %s215 = smul.addr %s214, 8
      %s216 = scalar_lea.vmem %s2, %s215
      %p217 = scmp.lt.s32.totalorder %s27, 1
      %s218 = scalar_select %p217, %s27, 1
      %s219 = smul.addr %s218, 2
      %s220 = smul.addr %s219, 8
      %s221 = scalar_lea.vmem %s3, %s220
      %p222 = scmp.lt.s32.totalorder %s27, 1
      %s223 = scalar_select %p222, %s27, 1
      %s224 = smul.addr %s223, 2
      %s225 = smul.addr %s224, 8
      %s226 = scalar_lea.vmem %s6, %s225
      %s228 = sld [smem:[#allocation3 + %s27]]
      %s229 = sld [smem:[#allocation4 + %s27]]
      %v230 = vld [vmem:[%s216] sm:$0xff]
      %v231 = vld [vmem:[%s221] sm:$0xff]
      %v232 = vld [vmem:[%s221 + $0x8] sm:$0xf]
      %v233 = vpack.c.bf16 %v230, %v230
      %v234 = vpack.c.bf16 %v232, %v231
      %v235 = vld [vmem:[%s4] sm:$0xff]
      %v236 = vld [vmem:[%s4 + $0x8] sm:$0xff]
      %v237 = vld [vmem:[%s4 + $0x10] sm:$0xff]
      %v238 = vld [vmem:[%s4 + $0x18] sm:$0xff]
      %v239 = vpack.c.bf16 %v236, %v235
      %v240 = vpack.c.bf16 %v238, %v237
      %v241 = vld [vmem:[%s5] sm:$0x1]
      %v243 = vlaneseq
      %v244 = vshrl.u32 %v243, 7
      %v245 = vsub.s32 0, %v244
      %v246 = vrot.slane %v241, %v245
      %vm248 = vcmask 261120
      %v250 = vsel %vm248, %v233, 0
      %252 = vmatprep.subr.bf16.mxu0 0
      %253 = vmatpush1.bf16.msra.mxu0 %v239
      %254 = vmatprep.subr.bf16.mxu0 0
      %255 = vmatpush1.bf16.msra.mxu0 %v240
      %256 = vmatprep.subr.bf16.mxu0 0
      %257 = vmatpush1.bf16.msra.mxu0 0
      %258 = vmatprep.subr.bf16.mxu0 0
      %259 = vmatpush1.bf16.msra.mxu0 0
      %260 = vmatprep.subr.bf16.mxu0 0
      %261 = vmatpush1.bf16.msra.mxu0 0
      %262 = vmatprep.subr.bf16.mxu0 0
      %263 = vmatpush1.bf16.msra.mxu0 0
      %264 = vmatprep.subr.bf16.mxu0 0
      %265 = vmatpush1.bf16.msra.mxu0 0
      %266 = vmatprep.subr.bf16.mxu0 0
      %267 = vmatpush1.bf16.msra.mxu0 0
      %268 = vmatprep.subr.bf16.mxu0 0
      %269 = vmatpush1.bf16.msra.mxu0 0
      %270 = vmatprep.subr.bf16.mxu0 0
      %271 = vmatpush1.bf16.msra.mxu0 0
      %272 = vmatprep.subr.bf16.mxu0 0
      %273 = vmatpush1.bf16.msra.mxu0 0
      %274 = vmatprep.subr.bf16.mxu0 0
      %275 = vmatpush1.bf16.msra.mxu0 0
      %276 = vmatprep.subr.bf16.mxu0 0
      %277 = vmatpush1.bf16.msra.mxu0 0
      %278 = vmatprep.subr.bf16.mxu0 0
      %279 = vmatpush1.bf16.msra.mxu0 0
      %280 = vmatprep.subr.bf16.mxu0 0
      %281 = vmatpush1.bf16.msra.mxu0 0
      %282 = vmatprep.subr.bf16.mxu0 0
      %283 = vmatpush1.bf16.msra.mxu0 0
      %284 = vmatprep.mubr.bf16.mxu0 0
      %285 = vmatmul.mubr.bf16.gmra.mrb[0].mxu0 %v250
      %v286 = vpop.f32.mrb[0].mxu0
      %v287 = vadd.f32 %v246, %v286
      %v288 = vpop.f32.mrb[0].mxu0
      %v289 = vpop.f32.mrb[0].mxu0
      %v290 = vpop.f32.mrb[0].mxu0
      %291 = vdwg.mxu0
      %v292 = vmax.f32 %v287, 0.0
      %v293 = vpack.c.bf16 %v292, %v292
      %v295 = vsel %vm248, %v234, 0
      %v298 = vsel %vm248, %v293, 0
      %300 = vmatprep.subr.bf16.mxu0 0
      %301 = vmatpush1.bf16.xpose.msra.mxu0 %v298
      %302 = vmatprep.subr.bf16.mxu0 0
      %303 = vmatpush1.bf16.xpose.msra.mxu0 0
      %304 = vmatprep.subr.bf16.mxu0 0
      %305 = vmatpush1.bf16.xpose.msra.mxu0 0
      %306 = vmatprep.subr.bf16.mxu0 0
      %307 = vmatpush1.bf16.xpose.msra.mxu0 0
      %308 = vmatprep.subr.bf16.mxu0 0
      %309 = vmatpush1.bf16.xpose.msra.mxu0 0
      %310 = vmatprep.subr.bf16.mxu0 0
      %311 = vmatpush1.bf16.xpose.msra.mxu0 0
      %312 = vmatprep.subr.bf16.mxu0 0
      %313 = vmatpush1.bf16.xpose.msra.mxu0 0
      %314 = vmatprep.subr.bf16.mxu0 0
      %315 = vmatpush1.bf16.xpose.msra.mxu0 0
      %316 = vmatprep.subr.bf16.mxu0 0
      %317 = vmatpush1.bf16.xpose.msra.mxu0 0
      %318 = vmatprep.subr.bf16.mxu0 0
      %319 = vmatpush1.bf16.xpose.msra.mxu0 0
      %320 = vmatprep.subr.bf16.mxu0 0
      %321 = vmatpush1.bf16.xpose.msra.mxu0 0
      %322 = vmatprep.subr.bf16.mxu0 0
      %323 = vmatpush1.bf16.xpose.msra.mxu0 0
      %324 = vmatprep.subr.bf16.mxu0 0
      %325 = vmatpush1.bf16.xpose.msra.mxu0 0
      %326 = vmatprep.subr.bf16.mxu0 0
      %327 = vmatpush1.bf16.xpose.msra.mxu0 0
      %328 = vmatprep.subr.bf16.mxu0 0
      %329 = vmatpush1.bf16.xpose.msra.mxu0 0
      %330 = vmatprep.subr.bf16.mxu0 0
      %331 = vmatpush1.bf16.xpose.msra.mxu0 0
      %332 = vmatprep.mubr.bf16.mxu0 0
      %333 = vmatmul.mubr.bf16.gmra.mrb[0].mxu0 %v295
      %v334 = vpop.f32.mrb[0].mxu0
      %v335 = vadd.f32 0.0, %v334
      %v336 = vpop.f32.mrb[0].mxu0
      %v337 = vpop.f32.mrb[0].mxu0
      %v338 = vadd.f32 0.0, %v337
      %v339 = vpop.f32.mrb[0].mxu0
      %340 = vdwg.mxu0
      %v341 = vlaneseq
      %v342 = vand.u32 %v341, 127
      %v343 = vstv %s228
      %vm344 = vcmp.lt.s32.totalorder %v342, %v343
      %v345 = vsel %vm344, %v335, -1e+23
      %v346 = vsel %vm344, %v338, -1e+23
      %vm347 = vcmask 64512
      %v348 = vsel %vm347, %v345, -inf
      %349 = vmax.xlane.f32.xlu0 %v348
      %v350 = vpop.xlane.xlu0 %349
      %vm351 = vcmask 60416
      %v352 = vsel %vm351, %v346, -inf
      %353 = vmax.xlane.f32.xlu0 %v352
      %v354 = vpop.xlane.xlu0 %353
      %v355 = vsub.f32 %v345, %v350
      %v356 = vsub.f32 %v346, %v354
      %v357 = vmul.f32 %v355, 1.442695
      %v358 = vpow.pop %v357
      %v359 = vmul.f32 %v356, 1.442695
      %v360 = vpow.pop %v359
      %v361 = vsel %vm347, %v358, 0.0
      %362 = vadd.xlane.f32.xlu0 %v361
      %v363 = vpop.xlane.xlu0 %362
      %v364 = vsel %vm351, %v360, 0.0
      %365 = vadd.xlane.f32.xlu0 %v364
      %v366 = vpop.xlane.xlu0 %365
      %v367 = vrcp.pop %v363
      %v368 = vrcp.pop %v366
      %v369 = vmul.f32 %v358, %v367
      %v370 = vmul.f32 %v360, %v368
      %v371 = vpack.c.bf16 %v370, %v369
      %v373 = vsel %vm347, %v371, 0
      %vm375 = vcmask 1043456
      %v376 = vsel %vm375, %v233, 0
      %378 = vmatprep.subr.bf16.mxu0 0
      %379 = vmatpush1.bf16.msra.mxu0 %v376
      %380 = vmatprep.subr.bf16.mxu0 0
      %381 = vmatpush1.bf16.msra.mxu0 0
      %382 = vmatprep.subr.bf16.mxu0 0
      %383 = vmatpush1.bf16.msra.mxu0 0
      %384 = vmatprep.subr.bf16.mxu0 0
      %385 = vmatpush1.bf16.msra.mxu0 0
      %386 = vmatprep.subr.bf16.mxu0 0
      %387 = vmatpush1.bf16.msra.mxu0 0
      %388 = vmatprep.subr.bf16.mxu0 0
      %389 = vmatpush1.bf16.msra.mxu0 0
      %390 = vmatprep.subr.bf16.mxu0 0
      %391 = vmatpush1.bf16.msra.mxu0 0
      %392 = vmatprep.subr.bf16.mxu0 0
      %393 = vmatpush1.bf16.msra.mxu0 0
      %394 = vmatprep.subr.bf16.mxu0 0
      %395 = vmatpush1.bf16.msra.mxu0 0
      %396 = vmatprep.subr.bf16.mxu0 0
      %397 = vmatpush1.bf16.msra.mxu0 0
      %398 = vmatprep.subr.bf16.mxu0 0
      %399 = vmatpush1.bf16.msra.mxu0 0
      %400 = vmatprep.subr.bf16.mxu0 0
      %401 = vmatpush1.bf16.msra.mxu0 0
      %402 = vmatprep.subr.bf16.mxu0 0
      %403 = vmatpush1.bf16.msra.mxu0 0
      %404 = vmatprep.subr.bf16.mxu0 0
      %405 = vmatpush1.bf16.msra.mxu0 0
      %406 = vmatprep.subr.bf16.mxu0 0
      %407 = vmatpush1.bf16.msra.mxu0 0
      %408 = vmatprep.subr.bf16.mxu0 0
      %409 = vmatpush1.bf16.msra.mxu0 0
      %410 = vmatprep.mubr.bf16.mxu0 0
      %411 = vmatmul.mubr.bf16.gmra.mrb[0].mxu0 %v373
      %v412 = vpop.f32.mrb[0].mxu0
      %v413 = vadd.f32 %v231, %v412
      %v414 = vpop.f32.mrb[0].mxu0
      %v415 = vpop.f32.mrb[0].mxu0
      %v416 = vadd.f32 %v232, %v415
      %v417 = vpop.f32.mrb[0].mxu0
      %418 = vdwg.mxu0
      %v419 = vlaneseq
      %v420 = vshrl.u32 %v419, 7
      %v421 = vadd.s32 %v420, 8
      %v422 = vstv %s229
      %vm423 = vcmp.lt.s32.totalorder %v420, %v422
      %vm424 = vcmp.lt.s32.totalorder %v421, %v422
      %v425 = vsel %vm423, %v413, 0.0
      %v426 = vsel %vm424, %v416, 0.0
      %427 = vst.msk [vmem:[%s226] sm:$0xff] %vm248, %v425
      %vm428 = vcmask 257024
      %429 = vst.msk [vmem:[%s226 + $0x8] sm:$0xf] %vm428, %v426
      %p430 = scmp.lt.s32.totalorder %s27, 1
      %s431 = scalar_select %p430, %s27, 1
      %s432 = smul.addr %s431, 2
      %s433 = smul.addr %s432, 8
      %s434 = scalar_lea.vmem %s6, %s433
      // Predicated region
      $region37: #{product_aware_attention.1} parent=35 // pred_check
        %p435 = pneg %p139
      $region38: #{product_aware_attention.1} parent=35 // pred_check_branch
        %437 = sbr.rel (%p435) target = $region40
      $region39: #{product_aware_attention.1} parent=35 // pred_region
        _
      $region40: #{product_aware_attention.1} parent=35 // pred_fallthru
        _
    $region36: #{product_aware_attention.1} parent=5 // pred_fallthru
      _
    %p438 = scmp.le.s32.totalorder 2, %s22
    // Predicated region
    $region41: #{product_aware_attention.1} parent=5 // pred_check
      %p439 = pneg %p438
    $region42: #{product_aware_attention.1} parent=5 // pred_check_branch
      %441 = sbr.rel (%p439) target = $region44
    $region43: #{product_aware_attention.1} parent=5 // pred_region
      %s442 = ssub.s32 %s22, 2
      // Predicated region
      $region45: #{product_aware_attention.1} parent=43 // pred_check
        %p443 = pneg %p145
      $region46: #{product_aware_attention.1} parent=43 // pred_check_branch
        %445 = sbr.rel (%p443) target = $region48
      $region47: #{product_aware_attention.1} parent=43 // pred_region
        %p446 = scmp.lt.s32.totalorder %s28, 1
        %s447 = scalar_select %p446, %s28, 1
        %s448 = smul.addr %s447, 2
        %s449 = smul.addr %s448, 8
        %s450 = scalar_lea.vmem %s6, %s449
      $region48: #{product_aware_attention.1} parent=43 // pred_fallthru
        _
    $region44: #{product_aware_attention.1} parent=5 // pred_fallthru
      _
  $region6: #{product_aware_attention.1} parent=0 // loop_footer
    %s26 = sadd.s32 1, %s22
  $region7: #{product_aware_attention.1} parent=0 // loop_footer_branch
    %21 = sbr.rel target = $region3
  $region8: #{product_aware_attention.1} parent=0 // loop_exit
    _

</llo_original>
